<compile_context>
chip_gen: v7x
topology: tpu7x:2x2x1
jax: 0.10.0
libtpu: 0.0.40
codegen_flags: <defaults>
</compile_context>

<pallas_src>
import functools
import math

import jax
import jax.numpy as jnp
from jax.experimental import pallas as pl
from jax.experimental.pallas import tpu as pltpu


_VMEM_LIMIT_BYTES = 40 * 1024 * 1024   # > default 32 MiB, comfortable headroom under v7x's 64 MiB
_MASK_NEG = -1e30                      # large finite negative bias (avoids -inf -> NaN)
# exp / probabilities in compute_dtype (bf16) uses the bf16 EUP/VPU on v6e/v7x.
# Set to False on v5e (no bf16 EUP/VPU -> it would only add pack/unpack work).
_SOFTMAX_EXP_IN_COMPUTE_DTYPE = True


def _pick_tile(dim, cap, mult):
    """Largest tile <= cap that divides `dim` and is a multiple of `mult`; else the full dim."""
    t = (min(cap, dim) // mult) * mult
    while t >= mult:
        if dim % t == 0:
            return t
        t -= mult
    return dim


def _sublane_mult(compute_dtype):
    # bf16 vregs pack (16, 128): keep sublane-dim tiles a multiple of 16 when possible.
    return 16 if jnp.dtype(compute_dtype) == jnp.dtype(jnp.bfloat16) else 8


# ----------------------------------------------------------------------------- linear (K-tiled GEMM + bias)
def _linear_kernel(x_ref, w_ref, b_ref, o_ref, acc_ref, *, compute_dtype):
    k = pl.program_id(2)

    @pl.when(k == 0)
    def _():
        acc_ref[...] = jnp.zeros_like(acc_ref)

    acc_ref[...] += jnp.dot(x_ref[...].astype(compute_dtype),
                            w_ref[...].astype(compute_dtype),
                            preferred_element_type=jnp.float32)

    @pl.when(k == pl.num_programs(2) - 1)
    def _():
        o_ref[...] = (acc_ref[...] + b_ref[...].astype(jnp.float32)).astype(o_ref.dtype)


def _linear(x2d, w, b, *, compute_dtype, out_dtype):
    """out = x2d @ w + b, tiled over (M, N, K) with an fp32 VMEM accumulator."""
    M, K = x2d.shape
    _, N = w.shape
    tm = _pick_tile(M, 512, _sublane_mult(compute_dtype))
    tn = _pick_tile(N, 512, 128)
    tk = _pick_tile(K, 512, 128)

    cost = pl.CostEstimate(
        flops=2 * M * K * N,
        transcendentals=0,
        # Includes the operand re-read factors (x once per column tile, W once per row tile).
        bytes_accessed=int(x2d.dtype.itemsize * M * K * (N // tn)
                           + w.dtype.itemsize * K * N * (M // tm)
                           + b.dtype.itemsize * N
                           + jnp.dtype(out_dtype).itemsize * M * N),
    )
    kern = functools.partial(_linear_kernel, compute_dtype=compute_dtype)
    return pl.pallas_call(
        kern,
        out_shape=jax.ShapeDtypeStruct((M, N), out_dtype),
        grid=(M // tm, N // tn, K // tk),
        in_specs=[
            pl.BlockSpec((tm, tk), lambda i, j, k: (i, k)),   # activation tile
            pl.BlockSpec((tk, tn), lambda i, j, k: (k, j)),   # weight tile
            pl.BlockSpec((1, tn), lambda i, j, k: (0, j)),    # bias column tile
        ],
        out_specs=pl.BlockSpec((tm, tn), lambda i, j, k: (i, j)),
        scratch_shapes=[pltpu.VMEM((tm, tn), jnp.float32)],
        compiler_params=pltpu.CompilerParams(
            dimension_semantics=("parallel", "parallel", "arbitrary"),
            vmem_limit_bytes=_VMEM_LIMIT_BYTES,
        ),
        cost_estimate=cost,
    )(x2d, w, b)


# ----------------------------------------------------------------------------- flash attention
def _flash_kernel(*refs, scale, compute_dtype, has_bias, approx_recip, exp_dtype):
    if has_bias:
        q_ref, k_ref, v_ref, bias_ref, o_ref, m_sc, l_sc, acc_sc = refs
    else:
        q_ref, k_ref, v_ref, o_ref, m_sc, l_sc, acc_sc = refs
        bias_ref = None

    kv = pl.program_id(2)

    @pl.when(kv == 0)
    def _():
        m_sc[...] = jnp.full_like(m_sc, -jnp.inf)
        l_sc[...] = jnp.zeros_like(l_sc)
        acc_sc[...] = jnp.zeros_like(acc_sc)

    # Blocks (batch + qkv-plane axes squeezed): q (tq, H, D); k, v (tk, H, D).
    # Scale folded into q (cheaper than scaling the (H, tq, tk) score tensor).
    q = (q_ref[...] * scale).astype(compute_dtype)
    k = k_ref[...].astype(compute_dtype)
    v = v_ref[...].astype(compute_dtype)

    # Head-batched scores: (H, tq, tk), fp32 accumulation on the MXU.
    s = jnp.einsum('qhd,khd->hqk', q, k, preferred_element_type=jnp.float32)
    if has_bias:
        s = s + bias_ref[...]                       # (1, tk) key-padding bias, broadcast

    # Online softmax update (per head).
    m_prev = m_sc[...]                                               # (H, tq, 1)
    m_new = jnp.maximum(m_prev, jnp.max(s, axis=-1, keepdims=True))
    alpha = jnp.exp(m_prev - m_new)                                  # (H, tq, 1) fp32
    p = jnp.exp((s - m_new).astype(exp_dtype))                       # (H, tq, tk)
    l_sc[...] = alpha * l_sc[...] + jnp.sum(p, axis=-1, keepdims=True,
                                            dtype=jnp.float32)
    acc_sc[...] = alpha * acc_sc[...] + jnp.einsum(
        'hqk,khd->hqd', p.astype(compute_dtype), v,
        preferred_element_type=jnp.float32)
    m_sc[...] = m_new

    @pl.when(kv == pl.num_programs(2) - 1)
    def _():
        inv_l = pl.reciprocal(l_sc[...], approx=approx_recip)        # (H, tq, 1)
        out = acc_sc[...] * inv_l                                    # (H, tq, D)
        # Single once-per-q-tile relayout to the (T, H, D) output layout.
        o_ref[...] = jnp.transpose(out, (1, 0, 2)).astype(o_ref.dtype)


def _flash_attention(qkv, bias, *, compute_dtype, out_dtype):
    """qkv: (B, T, 3, H, D); bias: optional (B, 1, T) additive fp32 key bias.
    Returns attention output in (B, T, H, D) layout (head merge is free)."""
    B, T, _, H, D = qkv.shape
    tq = _pick_tile(T, 512, _sublane_mult(compute_dtype))
    tk = _pick_tile(T, 512, 128)
    has_bias = bias is not None
    scale = 1.0 / math.sqrt(D)

    # q / k / v are three windows of the SAME qkv tensor, selected purely through the
    # BlockSpec index maps (plane axis index 0/1/2) — no head split / HBM relayout.
    q_spec = pl.BlockSpec((None, tq, None, H, D), lambda b, i, j: (b, i, 0, 0, 0))
    k_spec = pl.BlockSpec((None, tk, None, H, D), lambda b, i, j: (b, j, 1, 0, 0))
    v_spec = pl.BlockSpec((None, tk, None, H, D), lambda b, i, j: (b, j, 2, 0, 0))
    in_specs = [q_spec, k_spec, v_spec]
    inputs = [qkv, qkv, qkv]
    if has_bias:
        in_specs.append(pl.BlockSpec((None, 1, tk), lambda b, i, j: (b, 0, j)))
        inputs.append(bias)

    C = H * D
    itemsize = qkv.dtype.itemsize
    cost = pl.CostEstimate(
        flops=4 * B * H * T * T * D,                 # QK^T + PV
        transcendentals=B * H * T * T,               # exp
        # q + output once, K/V re-read once per q-tile.
        bytes_accessed=int(itemsize * B * T * C * (2 + 2 * (T // tq))),
    )

    kern = functools.partial(
        _flash_kernel,
        scale=scale,
        compute_dtype=compute_dtype,
        has_bias=has_bias,
        approx_recip=(jnp.dtype(out_dtype) != jnp.dtype(jnp.float32)),
        exp_dtype=(compute_dtype if _SOFTMAX_EXP_IN_COMPUTE_DTYPE else jnp.float32),
    )

    return pl.pallas_call(
        kern,
        out_shape=jax.ShapeDtypeStruct((B, T, H, D), out_dtype),
        grid=(B, T // tq, T // tk),
        in_specs=in_specs,
        out_specs=pl.BlockSpec((None, tq, H, D), lambda b, i, j: (b, i, 0, 0)),
        scratch_shapes=[
            pltpu.VMEM((H, tq, 1), jnp.float32),    # running max
            pltpu.VMEM((H, tq, 1), jnp.float32),    # running denom
            pltpu.VMEM((H, tq, D), jnp.float32),    # output accumulator
        ],
        compiler_params=pltpu.CompilerParams(
            dimension_semantics=("parallel", "parallel", "arbitrary"),
            vmem_limit_bytes=_VMEM_LIMIT_BYTES,
        ),
        cost_estimate=cost,
    )(*inputs)


# ----------------------------------------------------------------------------- full sublayer
def causal_self_attention(x, w_attn, b_attn, w_proj, b_proj, *, n_head, mask=None,
                          compute_dtype=jnp.bfloat16):
    """x: (B, T, C); w_attn: (C, 3C); b_attn: (1, 3C); w_proj: (C, C); b_proj: (1, C);
    mask: optional (B, T) of {0, 1} (1 = attend)."""
    B, T, C = x.shape
    assert C % n_head == 0
    H, D = n_head, C // n_head

    # qkv projection; intermediate kept in compute_dtype (halves its HBM traffic).
    qkv2d = _linear(x.reshape(B * T, C), w_attn, b_attn,
                    compute_dtype=compute_dtype, out_dtype=compute_dtype)

    # Free reshape: c_attn columns are laid out as (3, H, D), so this matches the
    # PyTorch split + view with zero data movement.
    qkv = qkv2d.reshape(B, T, 3, H, D)

    # Mask -> additive bias only when present (no work at all when mask is None).
    # NB: a row whose keys are ALL masked yields a finite uniform distribution over
    # the masked keys instead of the reference's NaN (softmax over all -inf).
    bias = None
    if mask is not None:
        bias = jnp.where(mask == 0, _MASK_NEG, 0.0).astype(jnp.float32).reshape(B, 1, T)
    # TODO(synk): for padding-heavy batches, prefetch per-batch valid lengths
    # (PrefetchScalarGridSpec) and skip fully-masked kv tiles entirely.

    y = _flash_attention(qkv, bias, compute_dtype=compute_dtype,
                         out_dtype=compute_dtype)                    # (B, T, H, D)

    # Head merge is already in the layout -> free reshape, then output projection.
    out = _linear(y.reshape(B * T, C), w_proj, b_proj,
                  compute_dtype=compute_dtype, out_dtype=x.dtype)
    return out.reshape(B, T, C)


# ----------------------------------------------------------------------------- reference
def _reference(x, w_attn, b_attn, w_proj, b_proj, *, n_head, mask=None):
    """Plain-JAX transcription of the PyTorch forward (for checking)."""
    B, T, C = x.shape
    hd = C // n_head
    qkv = x @ w_attn + b_attn[0]
    q, k, v = jnp.split(qkv, 3, axis=-1)
    q = q.reshape(B, T, n_head, hd).transpose(0, 2, 1, 3)
    k = k.reshape(B, T, n_head, hd).transpose(0, 2, 1, 3)
    v = v.reshape(B, T, n_head, hd).transpose(0, 2, 1, 3)
    att = (q @ k.transpose(0, 1, 3, 2)) * (1.0 / math.sqrt(hd))
    if mask is not None:
        att = jnp.where(mask[:, None, None, :] == 0, -jnp.inf, att)
    att = jax.nn.softmax(att, axis=-1)
    y = att @ v
    y = y.transpose(0, 2, 1, 3).reshape(B, T, C)
    return y @ w_proj + b_proj[0]


if __name__ == "__main__":
    # Small shapes consistent with the module: hidden_dim=32, n_head=4, seq=8, batch=2.
    B, T, C, n_head = 2, 8, 32, 4

    key = jax.random.PRNGKey(0)
    kx, k1, k2, k3, k4 = jax.random.split(key, 5)

    x = jax.random.normal(kx, (B, T, C), dtype=jnp.float32)
    # nn.Linear(hidden, 3*hidden) weight is (3C, C); we store its transpose (C, 3C).
    w_attn = jax.random.normal(k1, (C, 3 * C), dtype=jnp.float32) * (1.0 / math.sqrt(C))
    b_attn = jax.random.normal(k2, (1, 3 * C), dtype=jnp.float32) * 0.02
    w_proj = jax.random.normal(k3, (C, C), dtype=jnp.float32) * (1.0 / math.sqrt(C))
    b_proj = jax.random.normal(k4, (1, C), dtype=jnp.float32) * 0.02

    # Key-padding mask: batch 0 fully attended, batch 1 masks the last 3 keys.
    mask = jnp.array([[1] * T, [1] * (T - 3) + [0] * 3], dtype=jnp.float32)

    # Tolerances: the fp32-compute check is limited by the TPU MXU's default (bf16-ish)
    # matmul precision, which affects both the Pallas kernels and the jnp reference.
    TOL_F32 = dict(atol=2e-2, rtol=2e-2)

    # 1) fp32 compute path, no mask.
    out_fp32 = causal_self_attention(x, w_attn, b_attn, w_proj, b_proj,
                                     n_head=n_head, mask=None,
                                     compute_dtype=jnp.float32)
    out_fp32 = jax.block_until_ready(out_fp32)
    ref = _reference(x, w_attn, b_attn, w_proj, b_proj, n_head=n_head, mask=None)
    assert out_fp32.shape == (B, T, C)
    assert jnp.allclose(out_fp32, ref, **TOL_F32), "fp32 (no mask) mismatch"

    # 2) fp32 compute path, with key-padding mask.
    out_fp32_m = causal_self_attention(x, w_attn, b_attn, w_proj, b_proj,
                                       n_head=n_head, mask=mask,
                                       compute_dtype=jnp.float32)
    out_fp32_m = jax.block_until_ready(out_fp32_m)
    ref_m = _reference(x, w_attn, b_attn, w_proj, b_proj, n_head=n_head, mask=mask)
    assert jnp.allclose(out_fp32_m, ref_m, **TOL_F32), "fp32 (mask) mismatch"

    # 3) default bf16 MXU path (fp32 accumulation, bf16 intermediates) -> loose check.
    out_bf16 = causal_self_attention(x, w_attn, b_attn, w_proj, b_proj,
                                     n_head=n_head, mask=mask)
    out_bf16 = jax.block_until_ready(out_bf16)
    assert out_bf16.dtype == x.dtype
    assert jnp.allclose(out_bf16, ref_m, atol=1e-1, rtol=1e-1), "bf16 path mismatch"

    print("KERNEL_OK")
</pallas_src>

<mosaic_0001>
module attributes {stable_mosaic.version = 11 : i64} {
  func.func @_linear_kernel(%arg0: i32, %arg1: i32, %arg2: i32, %arg3: memref<16x32xf32, #tpu.memory_space<vmem>>, %arg4: memref<32x96xf32, #tpu.memory_space<vmem>>, %arg5: memref<1x96xf32, #tpu.memory_space<vmem>>, %arg6: memref<16x96xf32, #tpu.memory_space<vmem>>, %arg7: memref<16x96xf32, #tpu.memory_space<vmem>>) attributes {dimension_semantics = [#tpu.dimension_semantics<parallel>, #tpu.dimension_semantics<parallel>, #tpu.dimension_semantics<arbitrary>], iteration_bounds = array<i64: 1, 1, 1>, scalar_prefetch = 0 : i64, scratch_operands = 1 : i64, tpu.core_type = #tpu.core_type<tc>, window_params = [{transform_indices = @transform_0, window_bounds = array<i64: 16, 32>}, {transform_indices = @transform_1, window_bounds = array<i64: 32, 96>}, {transform_indices = @transform_2, window_bounds = array<i64: 1, 96>}, {transform_indices = @transform_3, window_bounds = array<i64: 16, 96>}]} {
    %c0_i32 = arith.constant 0 : i32
    %0 = arith.cmpi eq, %arg2, %c0_i32 : i32
    %1 = arith.extui %0 : i1 to i32
    %c0_i32_0 = arith.constant 0 : i32
    %2 = arith.cmpi ne, %1, %c0_i32_0 : i32
    scf.if %2 {
      %cst_10 = arith.constant 0.000000e+00 : f32
      %12 = vector.broadcast %cst_10 : f32 to vector<16x96xf32>
      %c0_11 = arith.constant 0 : index
      %c0_12 = arith.constant 0 : index
      %13 = vector.load %arg7[%c0_11, %c0_12] : memref<16x96xf32, #tpu.memory_space<vmem>>, vector<16x96xf32>
      tpu.vector_store %arg7[%c0_11, %c0_12], %12 {strides = array<i32>} : memref<16x96xf32, #tpu.memory_space<vmem>>, vector<16x96xf32>,
    } else {
    }
    %c0 = arith.constant 0 : index
    %c0_1 = arith.constant 0 : index
    %3 = vector.load %arg7[%c0, %c0_1] : memref<16x96xf32, #tpu.memory_space<vmem>>, vector<16x96xf32>
    %c0_2 = arith.constant 0 : index
    %c0_3 = arith.constant 0 : index
    %4 = vector.load %arg3[%c0_2, %c0_3] : memref<16x32xf32, #tpu.memory_space<vmem>>, vector<16x32xf32>
    %c0_4 = arith.constant 0 : index
    %c0_5 = arith.constant 0 : index
    %5 = vector.load %arg4[%c0_4, %c0_5] : memref<32x96xf32, #tpu.memory_space<vmem>>, vector<32x96xf32>
    %cst = arith.constant dense<0.000000e+00> : vector<16x96xf32>
    %6 = tpu.matmul %4, %5, %cst {dimension_numbers = #tpu.dot_dimension_numbers<[1], [0], [0], [1], [0, 0, 1, 1], [], []>} : vector<16x32xf32>, vector<32x96xf32>, vector<16x96xf32> -> vector<16x96xf32>
    %7 = arith.addf %3, %6 : vector<16x96xf32>
    %c0_6 = arith.constant 0 : index
    %c0_7 = arith.constant 0 : index
    %8 = vector.load %arg7[%c0_6, %c0_7] : memref<16x96xf32, #tpu.memory_space<vmem>>, vector<16x96xf32>
    tpu.vector_store %arg7[%c0_6, %c0_7], %7 {strides = array<i32>} : memref<16x96xf32, #tpu.memory_space<vmem>>, vector<16x96xf32>,
    %c0_i32_8 = arith.constant 0 : i32
    %9 = arith.cmpi eq, %arg2, %c0_i32_8 : i32
    %10 = arith.extui %9 : i1 to i32
    %c0_i32_9 = arith.constant 0 : i32
    %11 = arith.cmpi ne, %10, %c0_i32_9 : i32
    scf.if %11 {
      %c0_10 = arith.constant 0 : index
      %c0_11 = arith.constant 0 : index
      %12 = vector.load %arg7[%c0_10, %c0_11] : memref<16x96xf32, #tpu.memory_space<vmem>>, vector<16x96xf32>
      %c0_12 = arith.constant 0 : index
      %c0_13 = arith.constant 0 : index
      %13 = vector.load %arg5[%c0_12, %c0_13] : memref<1x96xf32, #tpu.memory_space<vmem>>, vector<1x96xf32>
      %14 = vector.broadcast %13 : vector<1x96xf32> to vector<16x96xf32>
      %15 = arith.addf %12, %14 : vector<16x96xf32>
      %c0_14 = arith.constant 0 : index
      %c0_15 = arith.constant 0 : index
      %16 = vector.load %arg6[%c0_14, %c0_15] : memref<16x96xf32, #tpu.memory_space<vmem>>, vector<16x96xf32>
      tpu.vector_store %arg6[%c0_14, %c0_15], %15 {strides = array<i32>} : memref<16x96xf32, #tpu.memory_space<vmem>>, vector<16x96xf32>,
    } else {
    }
    return
  }
  func.func @transform_0(%arg0: i32, %arg1: i32, %arg2: i32) -> (i32, i32) {
    %c0_i32 = arith.constant 0 : i32
    return %arg0, %arg2 : i32, i32
  }
  func.func @transform_1(%arg0: i32, %arg1: i32, %arg2: i32) -> (i32, i32) {
    %c0_i32 = arith.constant 0 : i32
    return %arg2, %arg1 : i32, i32
  }
  func.func @transform_2(%arg0: i32, %arg1: i32, %arg2: i32) -> (i32, i32) {
    %c0_i32 = arith.constant 0 : i32
    %c0_i32_0 = arith.constant 0 : i32
    return %c0_i32, %arg1 : i32, i32
  }
  func.func @transform_3(%arg0: i32, %arg1: i32, %arg2: i32) -> (i32, i32) {
    %c0_i32 = arith.constant 0 : i32
    return %arg0, %arg1 : i32, i32
  }
}

</mosaic_0001>

<llo_original>
// kernel: tpu_custom_call.1
$region0: #{tpu_custom_call.1}
  #allocation0 [shape = 'u32[]', space=smem, size = 0x4, offset = 0x4, fixed_abs, tag = 'smem constant byte address 0x4 - core index']
  #allocation1 [shape = 'u32[144,128]{1,0:T(1,128)}', space=vmem, size = 0x12000, scoped, tag = 'internal scratch']
  #allocation2 [shape = 'f32[16,96]{1,0:T(8,128)}', space=vmem, size = 0x2000, scoped, tag = 'scratch operand']
  %s0 = inlined_call_operand.hbm [shape: f32[16,32], index: 0, kind: input, shape index: {}]
  %s1 = inlined_call_operand.hbm [shape: f32[32,96], index: 1, kind: input, shape index: {}]
  %s2 = inlined_call_operand.vmem [shape: f32[1,96], index: 2, kind: input, shape index: {}]
  %s3 = inlined_call_operand.hbm [shape: f32[16,96], index: 3, kind: output, shape index: {}]
  %s4 = sld [smem:[#allocation0]]
  $region38: #{tpu_custom_call.1} parent=0
    _
  %s6 = ssub.s32 1, %s4
  %s7 = scalar_select 0, %s6, %s4
  $region1: #{tpu_custom_call.1} parent=0
    #allocation3 [shape = 'u8[8192]{0}', space=vmem, size = 0x2000, scoped, tag = 'input window, operand 0, single buffered']
    #allocation4 [shape = 's32[1]{0}', space=sflag, size = 0x4, scoped, tag = 'scoped memory for tpu_custom_call.1']
    #allocation5 [shape = 's32[1]{0}', space=sflag, size = 0x4, scoped, tag = 'scoped memory for tpu_custom_call.1']
    #allocation6 [shape = 'u8[16384]{0}', space=vmem, size = 0x4000, scoped, tag = 'input window, operand 1, single buffered']
    #allocation7 [shape = 's32[1]{0}', space=sflag, size = 0x4, scoped, tag = 'scoped memory for tpu_custom_call.1']
    #allocation8 [shape = 'u8[8192]{0}', space=vmem, size = 0x2000, scoped, tag = 'output window, operand 0, single buffered']
    %8 = vsyncpa [#allocation4], 0
    %9 = vsyncpa [#allocation7], 0
    %10 = vsyncpa [#allocation5], 0
    // Predicated region
    $region2: #{tpu_custom_call.1} parent=1 // pred_check
      _
    $region3: #{tpu_custom_call.1} parent=1 // pred_check_branch
      %12 = sbr.rel (0) target = $region5
    $region4: #{tpu_custom_call.1} parent=1 // pred_region
      %s14 = ssub.s32 256, 256
      %15 = vsyncadd [#allocation4], %s14
      %s16 = sshll.u32 [#allocation3], 4
      %s17 = int_to_ptr.vmem [resolvable:$true] %s16
      %22 = dma.hbm_to_vmem [thread:$0]  %s0, 256, %s17, [#allocation4], 128, 128, 8
    $region5: #{tpu_custom_call.1} parent=1 // pred_fallthru
      _
    // Predicated region
    $region6: #{tpu_custom_call.1} parent=1 // pred_check
      _
    $region7: #{tpu_custom_call.1} parent=1 // pred_check_branch
      %24 = sbr.rel (0) target = $region9
    $region8: #{tpu_custom_call.1} parent=1 // pred_region
      %s26 = ssub.s32 512, 512
      %27 = vsyncadd [#allocation7], %s26
      %s28 = sshll.u32 [#allocation6], 4
      %s29 = int_to_ptr.vmem [resolvable:$true] %s28
      %34 = dma.hbm_to_vmem [thread:$0]  %s1, 512, %s29, [#allocation7], 128, 128, 8
    $region9: #{tpu_custom_call.1} parent=1 // pred_fallthru
      _
    // Predicated region
    $region10: #{tpu_custom_call.1} parent=1 // pred_check
      _
    $region11: #{tpu_custom_call.1} parent=1 // pred_check_branch
      %36 = sbr.rel (0) target = $region13
    $region12: #{tpu_custom_call.1} parent=1 // pred_region
      _
    $region13: #{tpu_custom_call.1} parent=1 // pred_fallthru
      _
    // Predicated region
    $region14: #{tpu_custom_call.1} parent=1 // pred_check
      _
    $region15: #{tpu_custom_call.1} parent=1 // pred_check_branch
      %38 = sbr.rel (0) target = $region17
    $region16: #{tpu_custom_call.1} parent=1 // pred_region
      %39 = dma.done [#allocation4], 256
    $region17: #{tpu_custom_call.1} parent=1 // pred_fallthru
      _
    // Predicated region
    $region18: #{tpu_custom_call.1} parent=1 // pred_check
      _
    $region19: #{tpu_custom_call.1} parent=1 // pred_check_branch
      %41 = sbr.rel (0) target = $region21
    $region20: #{tpu_custom_call.1} parent=1 // pred_region
      %42 = dma.done [#allocation7], 512
    $region21: #{tpu_custom_call.1} parent=1 // pred_fallthru
      _
    %p43 = scmp.eq.s32.totalorder 0, 0
    // Predicated region
    $region22: #{tpu_custom_call.1} parent=1 // pred_check
      %p44 = pneg %p43
    $region23: #{tpu_custom_call.1} parent=1 // pred_check_branch
      %46 = sbr.rel (%p44) target = $region25
    $region24: #{tpu_custom_call.1} parent=1 // pred_region
      %vm47 = vcmask 785408
      %48 = vst.msk [vmem:[#allocation2] sm:$0xff] %vm47, 0.0
      %49 = vst.msk [vmem:[#allocation2 + $0x8] sm:$0xff] %vm47, 0.0
    $region25: #{tpu_custom_call.1} parent=1 // pred_fallthru
      _
    %v50 = vld [vmem:[#allocation2] sm:$0xff]
    %v51 = vld [vmem:[#allocation2 + $0x8] sm:$0xff]
    %v52 = vld [vmem:[#allocation3] sm:$0xff]
    %v53 = vld [vmem:[#allocation3 + $0x8] sm:$0xff]
    %v54 = vld [vmem:[#allocation6] sm:$0xff]
    %v55 = vld [vmem:[#allocation6 + $0x8] sm:$0xff]
    %v56 = vld [vmem:[#allocation6 + $0x10] sm:$0xff]
    %v57 = vld [vmem:[#allocation6 + $0x18] sm:$0xff]
    %vm58 = vcmask 261120
    %v60 = vsel %vm58, %v52, 0
    %v63 = vsel %vm58, %v53, 0
    %65 = vmatprep.subr.mxu0 0.0
    %66 = vmatpush1.msra.mxu0 %v54
    %67 = vmatprep.subr.mxu0 0.0
    %68 = vmatpush1.msra.mxu0 %v55
    %69 = vmatprep.subr.mxu0 0.0
    %70 = vmatpush1.msra.mxu0 %v56
    %71 = vmatprep.subr.mxu0 0.0
    %72 = vmatpush1.msra.mxu0 %v57
    %73 = vmatprep.subr.mxu0 0.0
    %74 = vmatpush1.msra.mxu0 0.0
    %75 = vmatprep.subr.mxu0 0.0
    %76 = vmatpush1.msra.mxu0 0.0
    %77 = vmatprep.subr.mxu0 0.0
    %78 = vmatpush1.msra.mxu0 0.0
    %79 = vmatprep.subr.mxu0 0.0
    %80 = vmatpush1.msra.mxu0 0.0
    %81 = vmatprep.subr.mxu0 0.0
    %82 = vmatpush1.msra.mxu0 0.0
    %83 = vmatprep.subr.mxu0 0.0
    %84 = vmatpush1.msra.mxu0 0.0
    %85 = vmatprep.subr.mxu0 0.0
    %86 = vmatpush1.msra.mxu0 0.0
    %87 = vmatprep.subr.mxu0 0.0
    %88 = vmatpush1.msra.mxu0 0.0
    %89 = vmatprep.subr.mxu0 0.0
    %90 = vmatpush1.msra.mxu0 0.0
    %91 = vmatprep.subr.mxu0 0.0
    %92 = vmatpush1.msra.mxu0 0.0
    %93 = vmatprep.subr.mxu0 0.0
    %94 = vmatpush1.msra.mxu0 0.0
    %95 = vmatprep.subr.mxu0 0.0
    %96 = vmatpush1.msra.mxu0 0.0
    %97 = vmatprep.subr.mxu0 0.0
    %98 = vmatpush1.msra.mxu0 0.0
    %99 = vmatprep.subr.mxu0 0.0
    %100 = vmatpush1.msra.mxu0 0.0
    %101 = vmatprep.subr.mxu0 0.0
    %102 = vmatpush1.msra.mxu0 0.0
    %103 = vmatprep.subr.mxu0 0.0
    %104 = vmatpush1.msra.mxu0 0.0
    %105 = vmatprep.subr.mxu0 0.0
    %106 = vmatpush1.msra.mxu0 0.0
    %107 = vmatprep.subr.mxu0 0.0
    %108 = vmatpush1.msra.mxu0 0.0
    %109 = vmatprep.subr.mxu0 0.0
    %110 = vmatpush1.msra.mxu0 0.0
    %111 = vmatprep.subr.mxu0 0.0
    %112 = vmatpush1.msra.mxu0 0.0
    %113 = vmatprep.subr.mxu0 0.0
    %114 = vmatpush1.msra.mxu0 0.0
    %115 = vmatprep.subr.mxu0 0.0
    %116 = vmatpush1.msra.mxu0 0.0
    %117 = vmatprep.subr.mxu0 0.0
    %118 = vmatpush1.msra.mxu0 0.0
    %119 = vmatprep.subr.mxu0 0.0
    %120 = vmatpush1.msra.mxu0 0.0
    %121 = vmatprep.subr.mxu0 0.0
    %122 = vmatpush1.msra.mxu0 0.0
    %123 = vmatprep.subr.mxu0 0.0
    %124 = vmatpush1.msra.mxu0 0.0
    %125 = vmatprep.subr.mxu0 0.0
    %126 = vmatpush1.msra.mxu0 0.0
    %127 = vmatprep.subr.mxu0 0.0
    %128 = vmatpush1.msra.mxu0 0.0
    %129 = vmatprep.mubr.f32.mxu0 0.0
    %130 = vmatmul.mubr.f32.gmra.mrb[0].mxu0 %v60
    %v131 = vpop.f32.mrb[0].mxu0
    %v132 = vadd.f32 0.0, %v131
    %v133 = vpop.f32.mrb[0].mxu0
    %134 = vmatprep.mubr.f32.mxu0 0.0
    %135 = vmatmul.mubr.f32.gmra.mrb[0].mxu0 %v63
    %v136 = vpop.f32.mrb[0].mxu0
    %v137 = vadd.f32 0.0, %v136
    %v138 = vpop.f32.mrb[0].mxu0
    %139 = vdwg.mxu0
    %v140 = vadd.f32 %v50, %v132
    %v141 = vadd.f32 %v51, %v137
    %vm142 = vcmask 785408
    %143 = vst.msk [vmem:[#allocation2] sm:$0xff] %vm142, %v140
    %144 = vst.msk [vmem:[#allocation2 + $0x8] sm:$0xff] %vm142, %v141
    // Predicated region
    $region26: #{tpu_custom_call.1} parent=1 // pred_check
      %p145 = pneg %p43
    $region27: #{tpu_custom_call.1} parent=1 // pred_check_branch
      %147 = sbr.rel (%p145) target = $region29
    $region28: #{tpu_custom_call.1} parent=1 // pred_region
      %v148 = vld [vmem:[#allocation2] sm:$0xff]
      %v149 = vld [vmem:[#allocation2 + $0x8] sm:$0xff]
      %v150 = vld [vmem:[%s2] sm:$0x1]
      %v152 = vlaneseq
      %v153 = vshrl.u32 %v152, 7
      %v154 = vsub.s32 0, %v153
      %v155 = vrot.slane %v150, %v154
      %v157 = vadd.f32 %v148, %v155
      %v158 = vadd.f32 %v149, %v155
      %159 = vst.msk [vmem:[#allocation8] sm:$0xff] %vm142, %v157
      %160 = vst.msk [vmem:[#allocation8 + $0x8] sm:$0xff] %vm142, %v158
    $region29: #{tpu_custom_call.1} parent=1 // pred_fallthru
      _
    // Predicated region
    $region30: #{tpu_custom_call.1} parent=1 // pred_check
      _
    $region31: #{tpu_custom_call.1} parent=1 // pred_check_branch
      %162 = sbr.rel (0) target = $region33
    $region32: #{tpu_custom_call.1} parent=1 // pred_region
      %s164 = ssub.s32 256, 256
      %165 = vsyncadd [#allocation5], %s164
      %s166 = sshll.u32 [#allocation8], 4
      %s167 = int_to_ptr.vmem [resolvable:$true] %s166
      %172 = dma.vmem_to_hbm [thread:$0]  %s167, 256, %s3, [#allocation5], 128, 128, 8
    $region33: #{tpu_custom_call.1} parent=1 // pred_fallthru
      _
    // Predicated region
    $region34: #{tpu_custom_call.1} parent=1 // pred_check
      _
    $region35: #{tpu_custom_call.1} parent=1 // pred_check_branch
      %174 = sbr.rel (0) target = $region37
    $region36: #{tpu_custom_call.1} parent=1 // pred_region
      %175 = dma.done [#allocation5], 256
    $region37: #{tpu_custom_call.1} parent=1 // pred_fallthru
      _
    %176 = vsyncpa [#allocation4], 1
    %177 = vsyncpa [#allocation7], 1
    %178 = vsyncpa [#allocation5], 1

</llo_original>
